<compile_context>
chip_gen: v6e
topology: v6e:2x2x1
jax: 0.10.0
libtpu: 0.0.40
codegen_flags: <defaults>
</compile_context>

<pallas_src>
import functools

import jax
import jax.numpy as jnp
from jax.experimental import pallas as pl
from jax.experimental.pallas import tpu as pltpu


_ACTIVATIONS = {
    "relu": lambda x: jnp.maximum(x, 0.0),
    "elu": jax.nn.elu,
    # torch.nn.GELU defaults to exact erf; approximate=False matches it.
    "gelu": lambda x: jax.nn.gelu(x, approximate=False),
}


def _round_up(x, m):
    return ((x + m - 1) // m) * m


def _resblock_fc_kernel(h_ref, w1_ref, b1_ref, w2_ref, b2_ref, w3_ref, b3_ref,
                        o_ref, *, act):
    # act -> Linear(dim, d_hidden): bf16 MXU operands, f32 accumulate, f32 bias
    x = act(h_ref[...].astype(jnp.float32)).astype(jnp.bfloat16)
    x = jnp.dot(x, w1_ref[...], preferred_element_type=jnp.float32) + b1_ref[...]
    # act -> Linear(d_hidden, d_hidden)
    x = act(x).astype(jnp.bfloat16)
    x = jnp.dot(x, w2_ref[...], preferred_element_type=jnp.float32) + b2_ref[...]
    # act -> Linear(d_hidden, dim)
    x = act(x).astype(jnp.bfloat16)
    x = jnp.dot(x, w3_ref[...], preferred_element_type=jnp.float32) + b3_ref[...]
    # residual add of the un-activated input (re-read the ref: shorter live range)
    o_ref[...] = (h_ref[...].astype(jnp.float32) + x).astype(o_ref.dtype)


def _vmem_budget_bytes():
    """Generation-aware VMEM budget (75% of physical), with a safe fallback."""
    try:
        cap = int(pltpu.get_tpu_info().vmem_capacity_bytes)
    except Exception:
        cap = 64 << 20  # v7x-sized conservative fallback
    return int(cap * 0.75)


def _choose_tb(B, dim, d_hidden, vmem_budget, itemsize):
    """Pick the batch tile: big enough to amortize per-step overhead, small
    enough to fit VMEM and (when worthwhile) to give >=2 grid steps."""
    bytes_per_row_hbm = dim * itemsize * 2            # read h tile + write out tile
    # target ~4 MiB of activation I/O per grid step
    tb = max(512, (4 << 20) // max(bytes_per_row_hbm, 1))
    # keep >=2 grid steps for v7x megacore when each half still moves >=1 MiB
    half = -(-B // 2)
    if half * bytes_per_row_hbm >= (1 << 20):
        tb = min(tb, half)
    # VMEM bound: double-buffered in/out tiles + ~3 live (tb, d_hidden) f32 temps,
    # plus the (double-buffered) resident bf16 weights.
    w_bytes = 2 * 2 * (dim * d_hidden + d_hidden * d_hidden + d_hidden * dim)
    per_row_vmem = 2 * 2 * dim * itemsize + 3 * max(d_hidden, dim) * 4
    avail = max(vmem_budget - w_bytes - (2 << 20), 1 << 20)
    tb = min(tb, avail // max(per_row_vmem, 1))
    tb = max(8, (tb // 8) * 8)
    if tb >= B:
        return B            # single full-extent block: layout-legal for any B
    return tb


def residual_block_fc(h, params, *, activation="relu", tb=None):
    """h: (B, dim). params: w1/w2/w3 stored transposed to (in, out); b1/b2/b3 1-D."""
    act = _ACTIVATIONS[activation]
    B, dim = h.shape
    d_hidden = params["w1"].shape[1]
    itemsize = jnp.dtype(h.dtype).itemsize

    vmem_budget = _vmem_budget_bytes()
    if tb is None:
        tb = _choose_tb(B, dim, d_hidden, vmem_budget, itemsize)
    tb = min(tb, B)
    if tb < B:
        tb = max(8, (tb // 8) * 8)

    # Pad the batch only if the tile does not divide it (no feature padding at all).
    B_p = _round_up(B, tb)
    h_in = jnp.pad(h, ((0, B_p - B), (0, 0))) if B_p != B else h
    grid = (B_p // tb,)

    w1 = params["w1"].astype(jnp.bfloat16)
    w2 = params["w2"].astype(jnp.bfloat16)
    w3 = params["w3"].astype(jnp.bfloat16)
    b1 = params["b1"].reshape(1, d_hidden).astype(jnp.float32)
    b2 = params["b2"].reshape(1, d_hidden).astype(jnp.float32)
    b3 = params["b3"].reshape(1, dim).astype(jnp.float32)

    # VMEM accounting: double-buffered in/out tiles, double-buffered bf16 weights
    # (constant index_map -> DMA'd once), f32 biases, ~3 live (tb, d_hidden) temps.
    io_bytes = 2 * 2 * tb * dim * itemsize
    w_bytes = 2 * 2 * (dim * d_hidden + d_hidden * d_hidden + d_hidden * dim)
    b_bytes = 2 * (2 * d_hidden + dim) * 4
    tmp_bytes = 3 * tb * max(d_hidden, dim) * 4
    vmem_bytes = int(min(vmem_budget,
                         max(16 << 20,
                             io_bytes + w_bytes + b_bytes + tmp_bytes + (4 << 20))))

    n_trans = 0 if activation == "relu" else B * (dim + 2 * d_hidden)
    cost = pl.CostEstimate(
        flops=2 * B * (dim * d_hidden + d_hidden * d_hidden + d_hidden * dim),
        transcendentals=n_trans,
        bytes_accessed=2 * B * dim * itemsize
        + (dim * d_hidden + d_hidden * d_hidden + d_hidden * dim) * 2
        + (2 * d_hidden + dim) * 4,
    )

    out = pl.pallas_call(
        functools.partial(_resblock_fc_kernel, act=act),
        out_shape=jax.ShapeDtypeStruct((B_p, dim), h.dtype),
        grid_spec=pltpu.PrefetchScalarGridSpec(
            num_scalar_prefetch=0,
            grid=grid,
            in_specs=[
                pl.BlockSpec((tb, dim), lambda i: (i, 0)),          # h tile
                pl.BlockSpec((dim, d_hidden), lambda i: (0, 0)),    # w1 (resident)
                pl.BlockSpec((1, d_hidden), lambda i: (0, 0)),      # b1
                pl.BlockSpec((d_hidden, d_hidden), lambda i: (0, 0)),  # w2
                pl.BlockSpec((1, d_hidden), lambda i: (0, 0)),      # b2
                pl.BlockSpec((d_hidden, dim), lambda i: (0, 0)),    # w3
                pl.BlockSpec((1, dim), lambda i: (0, 0)),           # b3
            ],
            out_specs=pl.BlockSpec((tb, dim), lambda i: (i, 0)),
        ),
        compiler_params=pltpu.CompilerParams(
            dimension_semantics=("parallel",),
            vmem_limit_bytes=vmem_bytes),
        cost_estimate=cost,
    )(h_in, w1, b1, w2, b2, w3, b3)

    return out[:B] if B_p != B else out


def init_params(key, dim, d_hidden):
    """Deterministic init mimicking PyTorch nn.Linear (uniform +-1/sqrt(fan_in)).
    Weights are stored already transposed to (in, out)."""
    k = jax.random.split(key, 6)

    def lin(kw, kb, fan_in, fan_out):
        bound = 1.0 / jnp.sqrt(fan_in)
        w = jax.random.uniform(kw, (fan_in, fan_out), jnp.float32, -bound, bound)
        b = jax.random.uniform(kb, (fan_out,), jnp.float32, -bound, bound)
        return w, b

    w1, b1 = lin(k[0], k[1], dim, d_hidden)
    w2, b2 = lin(k[2], k[3], d_hidden, d_hidden)
    w3, b3 = lin(k[4], k[5], d_hidden, dim)
    return {"w1": w1, "b1": b1, "w2": w2, "b2": b2, "w3": w3, "b3": b3}


def residual_block_fc_ref(h, params, activation="relu"):
    """Pure-JAX f32 reference (same math as the PyTorch module)."""
    act = _ACTIVATIONS[activation]
    x = act(h)
    x = x @ params["w1"] + params["b1"]
    x = act(x)
    x = x @ params["w2"] + params["b2"]
    x = act(x)
    x = x @ params["w3"] + params["b3"]
    return h + x


def residual_block_fc_bf16_ref(h, params, activation="relu"):
    """Reference that mimics the kernel's bf16 MXU operands / f32 accumulation."""
    act = _ACTIVATIONS[activation]

    def lin(x, w, b):
        return jnp.dot(x.astype(jnp.bfloat16), w.astype(jnp.bfloat16),
                       preferred_element_type=jnp.float32) + b

    x = lin(act(h), params["w1"], params["b1"])
    x = lin(act(x), params["w2"], params["b2"])
    x = lin(act(x), params["w3"], params["b3"])
    return h + x


if __name__ == "__main__":
    B, dim, d_hidden = 8, 32, 64
    key = jax.random.PRNGKey(0)
    k_h, k_p = jax.random.split(key)

    h = jax.random.normal(k_h, (B, dim), jnp.float32)
    params = init_params(k_p, dim, d_hidden)

    out = residual_block_fc(h, params, activation="relu")
    out = jax.block_until_ready(out)
    assert out.shape == (B, dim)

    # Tight check against a reference that uses the same bf16 operands /
    # f32 accumulation as the kernel.
    ref_bf16 = residual_block_fc_bf16_ref(h, params, "relu")
    assert jnp.allclose(out, ref_bf16, atol=3e-3, rtol=3e-3), \
        float(jnp.max(jnp.abs(out - ref_bf16)))

    # Looser sanity check against the pure-f32 PyTorch-equivalent math
    # (tolerance relaxed because the matmul operands are bf16 on the MXU).
    ref_f32 = residual_block_fc_ref(h, params, "relu")
    assert jnp.allclose(out, ref_f32, atol=5e-2, rtol=5e-2), \
        float(jnp.max(jnp.abs(out - ref_f32)))

    print("KERNEL_OK")
</pallas_src>

<mosaic_0001>
module attributes {stable_mosaic.version = 11 : i64} {
  func.func @_resblock_fc_kernel(%arg0: i32, %arg1: memref<8x32xf32, #tpu.memory_space<vmem>>, %arg2: memref<32x64xbf16, #tpu.memory_space<vmem>>, %arg3: memref<1x64xf32, #tpu.memory_space<vmem>>, %arg4: memref<64x64xbf16, #tpu.memory_space<vmem>>, %arg5: memref<1x64xf32, #tpu.memory_space<vmem>>, %arg6: memref<64x32xbf16, #tpu.memory_space<vmem>>, %arg7: memref<1x32xf32, #tpu.memory_space<vmem>>, %arg8: memref<8x32xf32, #tpu.memory_space<vmem>>) attributes {dimension_semantics = [#tpu.dimension_semantics<parallel>], iteration_bounds = array<i64: 1>, scalar_prefetch = 0 : i64, scratch_operands = 0 : i64, tpu.core_type = #tpu.core_type<tc>, window_params = [{transform_indices = @transform_0, window_bounds = array<i64: 8, 32>}, {pipeline_mode = #tpu.pipeline_mode<synchronous>, transform_indices = @transform_1, window_bounds = array<i64: 32, 64>}, {pipeline_mode = #tpu.pipeline_mode<synchronous>, transform_indices = @transform_2, window_bounds = array<i64: 1, 64>}, {pipeline_mode = #tpu.pipeline_mode<synchronous>, transform_indices = @transform_3, window_bounds = array<i64: 64, 64>}, {pipeline_mode = #tpu.pipeline_mode<synchronous>, transform_indices = @transform_4, window_bounds = array<i64: 1, 64>}, {pipeline_mode = #tpu.pipeline_mode<synchronous>, transform_indices = @transform_5, window_bounds = array<i64: 64, 32>}, {pipeline_mode = #tpu.pipeline_mode<synchronous>, transform_indices = @transform_6, window_bounds = array<i64: 1, 32>}, {transform_indices = @transform_7, window_bounds = array<i64: 8, 32>}]} {
    %c0 = arith.constant 0 : index
    %c0_0 = arith.constant 0 : index
    %0 = vector.load %arg1[%c0, %c0_0] : memref<8x32xf32, #tpu.memory_space<vmem>>, vector<8x32xf32>
    %cst = arith.constant 0.000000e+00 : f32
    %1 = vector.broadcast %cst : f32 to vector<8x32xf32>
    %2 = arith.maximumf %0, %1 : vector<8x32xf32>
    %3 = arith.truncf %2 : vector<8x32xf32> to vector<8x32xbf16>
    %c0_1 = arith.constant 0 : index
    %c0_2 = arith.constant 0 : index
    %4 = vector.load %arg2[%c0_1, %c0_2] : memref<32x64xbf16, #tpu.memory_space<vmem>>, vector<32x64xbf16>
    %cst_3 = arith.constant dense<0.000000e+00> : vector<8x64xf32>
    %5 = tpu.matmul %3, %4, %cst_3 {dimension_numbers = #tpu.dot_dimension_numbers<[1], [0], [0], [1], [0, 0, 1, 1], [], []>} : vector<8x32xbf16>, vector<32x64xbf16>, vector<8x64xf32> -> vector<8x64xf32>
    %c0_4 = arith.constant 0 : index
    %c0_5 = arith.constant 0 : index
    %6 = vector.load %arg3[%c0_4, %c0_5] : memref<1x64xf32, #tpu.memory_space<vmem>>, vector<1x64xf32>
    %7 = vector.broadcast %6 : vector<1x64xf32> to vector<8x64xf32>
    %8 = arith.addf %5, %7 : vector<8x64xf32>
    %cst_6 = arith.constant 0.000000e+00 : f32
    %9 = vector.broadcast %cst_6 : f32 to vector<8x64xf32>
    %10 = arith.maximumf %8, %9 : vector<8x64xf32>
    %11 = arith.truncf %10 : vector<8x64xf32> to vector<8x64xbf16>
    %c0_7 = arith.constant 0 : index
    %c0_8 = arith.constant 0 : index
    %12 = vector.load %arg4[%c0_7, %c0_8] : memref<64x64xbf16, #tpu.memory_space<vmem>>, vector<64x64xbf16>
    %cst_9 = arith.constant dense<0.000000e+00> : vector<8x64xf32>
    %13 = tpu.matmul %11, %12, %cst_9 {dimension_numbers = #tpu.dot_dimension_numbers<[1], [0], [0], [1], [0, 0, 1, 1], [], []>} : vector<8x64xbf16>, vector<64x64xbf16>, vector<8x64xf32> -> vector<8x64xf32>
    %c0_10 = arith.constant 0 : index
    %c0_11 = arith.constant 0 : index
    %14 = vector.load %arg5[%c0_10, %c0_11] : memref<1x64xf32, #tpu.memory_space<vmem>>, vector<1x64xf32>
    %15 = vector.broadcast %14 : vector<1x64xf32> to vector<8x64xf32>
    %16 = arith.addf %13, %15 : vector<8x64xf32>
    %cst_12 = arith.constant 0.000000e+00 : f32
    %17 = vector.broadcast %cst_12 : f32 to vector<8x64xf32>
    %18 = arith.maximumf %16, %17 : vector<8x64xf32>
    %19 = arith.truncf %18 : vector<8x64xf32> to vector<8x64xbf16>
    %c0_13 = arith.constant 0 : index
    %c0_14 = arith.constant 0 : index
    %20 = vector.load %arg6[%c0_13, %c0_14] : memref<64x32xbf16, #tpu.memory_space<vmem>>, vector<64x32xbf16>
    %cst_15 = arith.constant dense<0.000000e+00> : vector<8x32xf32>
    %21 = tpu.matmul %19, %20, %cst_15 {dimension_numbers = #tpu.dot_dimension_numbers<[1], [0], [0], [1], [0, 0, 1, 1], [], []>} : vector<8x64xbf16>, vector<64x32xbf16>, vector<8x32xf32> -> vector<8x32xf32>
    %c0_16 = arith.constant 0 : index
    %c0_17 = arith.constant 0 : index
    %22 = vector.load %arg7[%c0_16, %c0_17] : memref<1x32xf32, #tpu.memory_space<vmem>>, vector<1x32xf32>
    %23 = vector.broadcast %22 : vector<1x32xf32> to vector<8x32xf32>
    %24 = arith.addf %21, %23 : vector<8x32xf32>
    %c0_18 = arith.constant 0 : index
    %c0_19 = arith.constant 0 : index
    %25 = vector.load %arg1[%c0_18, %c0_19] : memref<8x32xf32, #tpu.memory_space<vmem>>, vector<8x32xf32>
    %26 = arith.addf %25, %24 : vector<8x32xf32>
    %c0_20 = arith.constant 0 : index
    %c0_21 = arith.constant 0 : index
    %27 = vector.load %arg8[%c0_20, %c0_21] : memref<8x32xf32, #tpu.memory_space<vmem>>, vector<8x32xf32>
    tpu.vector_store %arg8[%c0_20, %c0_21], %26 {strides = array<i32>} : memref<8x32xf32, #tpu.memory_space<vmem>>, vector<8x32xf32>,
    return
  }
  func.func @transform_0(%arg0: i32) -> (i32, i32) {
    %c0_i32 = arith.constant 0 : i32
    %c0_i32_0 = arith.constant 0 : i32
    return %arg0, %c0_i32 : i32, i32
  }
  func.func @transform_1(%arg0: i32) -> (i32, i32) {
    %c0_i32 = arith.constant 0 : i32
    %c0_i32_0 = arith.constant 0 : i32
    %c0_i32_1 = arith.constant 0 : i32
    return %c0_i32, %c0_i32_0 : i32, i32
  }
  func.func @transform_2(%arg0: i32) -> (i32, i32) {
    %c0_i32 = arith.constant 0 : i32
    %c0_i32_0 = arith.constant 0 : i32
    %c0_i32_1 = arith.constant 0 : i32
    return %c0_i32, %c0_i32_0 : i32, i32
  }
  func.func @transform_3(%arg0: i32) -> (i32, i32) {
    %c0_i32 = arith.constant 0 : i32
    %c0_i32_0 = arith.constant 0 : i32
    %c0_i32_1 = arith.constant 0 : i32
    return %c0_i32, %c0_i32_0 : i32, i32
  }
  func.func @transform_4(%arg0: i32) -> (i32, i32) {
    %c0_i32 = arith.constant 0 : i32
    %c0_i32_0 = arith.constant 0 : i32
    %c0_i32_1 = arith.constant 0 : i32
    return %c0_i32, %c0_i32_0 : i32, i32
  }
  func.func @transform_5(%arg0: i32) -> (i32, i32) {
    %c0_i32 = arith.constant 0 : i32
    %c0_i32_0 = arith.constant 0 : i32
    %c0_i32_1 = arith.constant 0 : i32
    return %c0_i32, %c0_i32_0 : i32, i32
  }
  func.func @transform_6(%arg0: i32) -> (i32, i32) {
    %c0_i32 = arith.constant 0 : i32
    %c0_i32_0 = arith.constant 0 : i32
    %c0_i32_1 = arith.constant 0 : i32
    return %c0_i32, %c0_i32_0 : i32, i32
  }
  func.func @transform_7(%arg0: i32) -> (i32, i32) {
    %c0_i32 = arith.constant 0 : i32
    %c0_i32_0 = arith.constant 0 : i32
    return %arg0, %c0_i32 : i32, i32
  }
}

</mosaic_0001>

<llo_original>
// kernel: tpu_custom_call.1
$region0: #{tpu_custom_call.1}
  #allocation0 [shape = 'u32[]', space=smem, size = 0x4, offset = 0x4, fixed_abs, tag = 'smem constant byte address 0x4 - core index']
  #allocation1 [shape = 'u32[144,128]{1,0:T(1,128)}', space=vmem, size = 0x12000, scoped, tag = 'internal scratch']
  %s0 = inlined_call_operand.hbm [shape: f32[8,32], index: 0, kind: input, shape index: {}]
  %s1 = inlined_call_operand.vmem [shape: bf16[32,64], index: 1, kind: input, shape index: {}]
  %s2 = inlined_call_operand.vmem [shape: f32[1,64], index: 2, kind: input, shape index: {}]
  %s3 = inlined_call_operand.vmem [shape: bf16[64,64], index: 3, kind: input, shape index: {}]
  %s4 = inlined_call_operand.vmem [shape: f32[1,64], index: 4, kind: input, shape index: {}]
  %s5 = inlined_call_operand.vmem [shape: bf16[64,32], index: 5, kind: input, shape index: {}]
  %s6 = inlined_call_operand.vmem [shape: f32[1,32], index: 6, kind: input, shape index: {}]
  %s7 = inlined_call_operand.hbm [shape: f32[8,32], index: 7, kind: output, shape index: {}]
  %s8 = sld [smem:[#allocation0]]
  $region42: #{tpu_custom_call.1} parent=0
    _
  %s10 = ssub.s32 1, %s8
  %s11 = scalar_select 0, %s10, %s8
  $region1: #{tpu_custom_call.1} parent=0
    #allocation2 [shape = 'u8[4096]{0}', space=vmem, size = 0x1000, scoped, tag = 'input window, operand 0, single buffered']
    #allocation3 [shape = 's32[1]{0}', space=sflag, size = 0x4, scoped, tag = 'scoped memory for tpu_custom_call.1']
    #allocation4 [shape = 's32[1]{0}', space=sflag, size = 0x4, scoped, tag = 'scoped memory for tpu_custom_call.1']
    #allocation5 [shape = 'u8[4096]{0}', space=vmem, size = 0x1000, scoped, tag = 'output window, operand 0, single buffered']
    %12 = vsyncpa [#allocation3], 0
    %13 = vsyncpa [#allocation4], 0
    // Predicated region
    $region2: #{tpu_custom_call.1} parent=1 // pred_check
      _
    $region3: #{tpu_custom_call.1} parent=1 // pred_check_branch
      %15 = sbr.rel (0) target = $region5
    $region4: #{tpu_custom_call.1} parent=1 // pred_region
      %s17 = ssub.s32 128, 128
      %18 = vsyncadd [#allocation3], %s17
      %s20 = sshll.u32 [#allocation2], 4
      %s21 = int_to_ptr.vmem [resolvable:$true] %s20
      %23 = dma.hbm_to_vmem [thread:$0]  %s0, 128, %s21, [#allocation3]
    $region5: #{tpu_custom_call.1} parent=1 // pred_fallthru
      _
    // Predicated region
    $region6: #{tpu_custom_call.1} parent=1 // pred_check
      _
    $region7: #{tpu_custom_call.1} parent=1 // pred_check_branch
      %25 = sbr.rel (0) target = $region9
    $region8: #{tpu_custom_call.1} parent=1 // pred_region
      _
    $region9: #{tpu_custom_call.1} parent=1 // pred_fallthru
      _
    // Predicated region
    $region10: #{tpu_custom_call.1} parent=1 // pred_check
      _
    $region11: #{tpu_custom_call.1} parent=1 // pred_check_branch
      %27 = sbr.rel (0) target = $region13
    $region12: #{tpu_custom_call.1} parent=1 // pred_region
      _
    $region13: #{tpu_custom_call.1} parent=1 // pred_fallthru
      _
    // Predicated region
    $region14: #{tpu_custom_call.1} parent=1 // pred_check
      _
    $region15: #{tpu_custom_call.1} parent=1 // pred_check_branch
      %29 = sbr.rel (0) target = $region17
    $region16: #{tpu_custom_call.1} parent=1 // pred_region
      _
    $region17: #{tpu_custom_call.1} parent=1 // pred_fallthru
      _
    // Predicated region
    $region18: #{tpu_custom_call.1} parent=1 // pred_check
      _
    $region19: #{tpu_custom_call.1} parent=1 // pred_check_branch
      %31 = sbr.rel (0) target = $region21
    $region20: #{tpu_custom_call.1} parent=1 // pred_region
      _
    $region21: #{tpu_custom_call.1} parent=1 // pred_fallthru
      _
    // Predicated region
    $region22: #{tpu_custom_call.1} parent=1 // pred_check
      _
    $region23: #{tpu_custom_call.1} parent=1 // pred_check_branch
      %33 = sbr.rel (0) target = $region25
    $region24: #{tpu_custom_call.1} parent=1 // pred_region
      _
    $region25: #{tpu_custom_call.1} parent=1 // pred_fallthru
      _
    // Predicated region
    $region26: #{tpu_custom_call.1} parent=1 // pred_check
      _
    $region27: #{tpu_custom_call.1} parent=1 // pred_check_branch
      %35 = sbr.rel (0) target = $region29
    $region28: #{tpu_custom_call.1} parent=1 // pred_region
      _
    $region29: #{tpu_custom_call.1} parent=1 // pred_fallthru
      _
    // Predicated region
    $region30: #{tpu_custom_call.1} parent=1 // pred_check
      _
    $region31: #{tpu_custom_call.1} parent=1 // pred_check_branch
      %37 = sbr.rel (0) target = $region33
    $region32: #{tpu_custom_call.1} parent=1 // pred_region
      %38 = dma.done [#allocation3], 128
    $region33: #{tpu_custom_call.1} parent=1 // pred_fallthru
      _
    %v40 = vld [vmem:[#allocation2] sm:$0xff]
    %v41 = vmax.f32 %v40, 0.0
    %v42 = vpack.c.bf16 %v41, %v41
    %v43 = vld [vmem:[%s1] sm:$0xf]
    %v44 = vld [vmem:[%s1 + $0x4] sm:$0xf]
    %v45 = vld [vmem:[%s1 + $0x8] sm:$0xf]
    %v46 = vld [vmem:[%s1 + $0xc] sm:$0xf]
    %v47 = vld [vmem:[%s2] sm:$0x1]
    %v49 = vlaneseq
    %v50 = vshrl.u32 %v49, 7
    %v51 = vsub.s32 0, %v50
    %v52 = vrot.slane %v47, %v51
    %v58 = vunpack.c.l.b16 %v43
    %v59 = vunpack.c.l.b16 %v44
    %v60 = vunpack.c.l.b16 %v45
    %v61 = vunpack.c.l.b16 %v46
    %v62 = vpack.c.b16 %v59, %v58
    %v63 = vpack.c.b16 %v61, %v60
    %vm66 = vcmask 261120
    %v68 = vsel %vm66, %v42, 0
    %70 = vmatprep.subr.bf16.mxu0 0
    %71 = vmatpush1.bf16.msra.mxu0 0
    %72 = vmatprep.subr.bf16.mxu0 0
    %73 = vmatpush1.bf16.msra.mxu0 0
    %74 = vmatprep.subr.bf16.mxu0 0
    %75 = vmatpush1.bf16.msra.mxu0 0
    %76 = vmatprep.subr.bf16.mxu0 0
    %77 = vmatpush1.bf16.msra.mxu0 0
    %78 = vmatprep.subr.bf16.mxu0 0
    %79 = vmatpush1.bf16.msra.mxu0 0
    %80 = vmatprep.subr.bf16.mxu0 0
    %81 = vmatpush1.bf16.msra.mxu0 0
    %82 = vmatprep.subr.bf16.mxu0 0
    %83 = vmatpush1.bf16.msra.mxu0 %v63
    %84 = vmatprep.subr.bf16.mxu0 0
    %85 = vmatpush1.bf16.msra.mxu0 %v62
    %86 = vmatprep.subr.bf16.mxu0 0
    %87 = vmatpush2.bf16.msra.mxu0 0
    %88 = vmatprep.subr.bf16.mxu0 0
    %89 = vmatpush2.bf16.msra.mxu0 0
    %90 = vmatprep.subr.bf16.mxu0 0
    %91 = vmatpush2.bf16.msra.mxu0 0
    %92 = vmatprep.subr.bf16.mxu0 0
    %93 = vmatpush2.bf16.msra.mxu0 0
    %94 = vmatprep.subr.bf16.mxu0 0
    %95 = vmatpush2.bf16.msra.mxu0 0
    %96 = vmatprep.subr.bf16.mxu0 0
    %97 = vmatpush2.bf16.msra.mxu0 0
    %98 = vmatprep.subr.bf16.mxu0 0
    %99 = vmatpush2.bf16.msra.mxu0 0
    %100 = vmatprep.subr.bf16.mxu0 0
    %101 = vmatpush2.bf16.msra.mxu0 0
    %102 = vmatprep.mubr.bf16.mxu0 0
    %103 = vmatmul.mubr.bf16.gmra.mxu0 %v68
    %v104 = vpop.f32.mrf.mxu0
    %v105 = vadd.f32 %v52, %v104
    %v106 = vpop.f32.mrf.mxu0
    %v107 = vpop.f32.mrf.mxu0
    %v108 = vpop.f32.mrf.mxu0
    %109 = vdwg.mxu0
    %v110 = vmax.f32 %v105, 0.0
    %v111 = vpack.c.bf16 %v110, %v110
    %v112 = vld [vmem:[%s3] sm:$0xf]
    %v113 = vld [vmem:[%s3 + $0x4] sm:$0xf]
    %v114 = vld [vmem:[%s3 + $0x8] sm:$0xf]
    %v115 = vld [vmem:[%s3 + $0xc] sm:$0xf]
    %v116 = vld [vmem:[%s3 + $0x10] sm:$0xf]
    %v117 = vld [vmem:[%s3 + $0x14] sm:$0xf]
    %v118 = vld [vmem:[%s3 + $0x18] sm:$0xf]
    %v119 = vld [vmem:[%s3 + $0x1c] sm:$0xf]
    %v120 = vld [vmem:[%s4] sm:$0x1]
    %v122 = vlaneseq
    %v123 = vshrl.u32 %v122, 7
    %v124 = vsub.s32 0, %v123
    %v125 = vrot.slane %v120, %v124
    %v135 = vunpack.c.l.b16 %v112
    %v136 = vunpack.c.l.b16 %v113
    %v137 = vunpack.c.l.b16 %v114
    %v138 = vunpack.c.l.b16 %v115
    %v139 = vunpack.c.l.b16 %v116
    %v140 = vunpack.c.l.b16 %v117
    %v141 = vunpack.c.l.b16 %v118
    %v142 = vunpack.c.l.b16 %v119
    %v143 = vpack.c.b16 %v136, %v135
    %v144 = vpack.c.b16 %v138, %v137
    %v145 = vpack.c.b16 %v140, %v139
    %v146 = vpack.c.b16 %v142, %v141
    %vm151 = vcmask 523264
    %v153 = vsel %vm151, %v111, 0
    %155 = vmatprep.subr.bf16.mxu0 0
    %156 = vmatpush1.bf16.msra.mxu0 0
    %157 = vmatprep.subr.bf16.mxu0 0
    %158 = vmatpush1.bf16.msra.mxu0 0
    %159 = vmatprep.subr.bf16.mxu0 0
    %160 = vmatpush1.bf16.msra.mxu0 0
    %161 = vmatprep.subr.bf16.mxu0 0
    %162 = vmatpush1.bf16.msra.mxu0 0
    %163 = vmatprep.subr.bf16.mxu0 0
    %164 = vmatpush1.bf16.msra.mxu0 %v146
    %165 = vmatprep.subr.bf16.mxu0 0
    %166 = vmatpush1.bf16.msra.mxu0 %v145
    %167 = vmatprep.subr.bf16.mxu0 0
    %168 = vmatpush1.bf16.msra.mxu0 %v144
    %169 = vmatprep.subr.bf16.mxu0 0
    %170 = vmatpush1.bf16.msra.mxu0 %v143
    %171 = vmatprep.subr.bf16.mxu0 0
    %172 = vmatpush2.bf16.msra.mxu0 0
    %173 = vmatprep.subr.bf16.mxu0 0
    %174 = vmatpush2.bf16.msra.mxu0 0
    %175 = vmatprep.subr.bf16.mxu0 0
    %176 = vmatpush2.bf16.msra.mxu0 0
    %177 = vmatprep.subr.bf16.mxu0 0
    %178 = vmatpush2.bf16.msra.mxu0 0
    %179 = vmatprep.subr.bf16.mxu0 0
    %180 = vmatpush2.bf16.msra.mxu0 0
    %181 = vmatprep.subr.bf16.mxu0 0
    %182 = vmatpush2.bf16.msra.mxu0 0
    %183 = vmatprep.subr.bf16.mxu0 0
    %184 = vmatpush2.bf16.msra.mxu0 0
    %185 = vmatprep.subr.bf16.mxu0 0
    %186 = vmatpush2.bf16.msra.mxu0 0
    %187 = vmatprep.mubr.bf16.mxu0 0
    %188 = vmatmul.mubr.bf16.gmra.mxu0 %v153
    %v189 = vpop.f32.mrf.mxu0
    %v190 = vadd.f32 %v125, %v189
    %v191 = vpop.f32.mrf.mxu0
    %v192 = vpop.f32.mrf.mxu0
    %v193 = vpop.f32.mrf.mxu0
    %194 = vdwg.mxu0
    %v195 = vmax.f32 %v190, 0.0
    %v196 = vpack.c.bf16 %v195, %v195
    %v197 = vld [vmem:[%s5] sm:$0xf]
    %v198 = vld [vmem:[%s5 + $0x4] sm:$0xf]
    %v199 = vld [vmem:[%s5 + $0x8] sm:$0xf]
    %v200 = vld [vmem:[%s5 + $0xc] sm:$0xf]
    %v201 = vld [vmem:[%s5 + $0x10] sm:$0xf]
    %v202 = vld [vmem:[%s5 + $0x14] sm:$0xf]
    %v203 = vld [vmem:[%s5 + $0x18] sm:$0xf]
    %v204 = vld [vmem:[%s5 + $0x1c] sm:$0xf]
    %v205 = vld [vmem:[%s6] sm:$0x1]
    %v207 = vlaneseq
    %v208 = vshrl.u32 %v207, 7
    %v209 = vsub.s32 0, %v208
    %v210 = vrot.slane %v205, %v209
    %v220 = vunpack.c.l.b16 %v197
    %v221 = vunpack.c.l.b16 %v198
    %v222 = vunpack.c.l.b16 %v199
    %v223 = vunpack.c.l.b16 %v200
    %v224 = vunpack.c.l.b16 %v201
    %v225 = vunpack.c.l.b16 %v202
    %v226 = vunpack.c.l.b16 %v203
    %v227 = vunpack.c.l.b16 %v204
    %v228 = vpack.c.b16 %v221, %v220
    %v229 = vpack.c.b16 %v223, %v222
    %v230 = vpack.c.b16 %v225, %v224
    %v231 = vpack.c.b16 %v227, %v226
    %v237 = vsel %vm151, %v196, 0
    %239 = vmatprep.subr.bf16.mxu0 0
    %240 = vmatpush1.bf16.msra.mxu0 0
    %241 = vmatprep.subr.bf16.mxu0 0
    %242 = vmatpush1.bf16.msra.mxu0 0
    %243 = vmatprep.subr.bf16.mxu0 0
    %244 = vmatpush1.bf16.msra.mxu0 0
    %245 = vmatprep.subr.bf16.mxu0 0
    %246 = vmatpush1.bf16.msra.mxu0 0
    %247 = vmatprep.subr.bf16.mxu0 0
    %248 = vmatpush1.bf16.msra.mxu0 %v231
    %249 = vmatprep.subr.bf16.mxu0 0
    %250 = vmatpush1.bf16.msra.mxu0 %v230
    %251 = vmatprep.subr.bf16.mxu0 0
    %252 = vmatpush1.bf16.msra.mxu0 %v229
    %253 = vmatprep.subr.bf16.mxu0 0
    %254 = vmatpush1.bf16.msra.mxu0 %v228
    %255 = vmatprep.subr.bf16.mxu0 0
    %256 = vmatpush2.bf16.msra.mxu0 0
    %257 = vmatprep.subr.bf16.mxu0 0
    %258 = vmatpush2.bf16.msra.mxu0 0
    %259 = vmatprep.subr.bf16.mxu0 0
    %260 = vmatpush2.bf16.msra.mxu0 0
    %261 = vmatprep.subr.bf16.mxu0 0
    %262 = vmatpush2.bf16.msra.mxu0 0
    %263 = vmatprep.subr.bf16.mxu0 0
    %264 = vmatpush2.bf16.msra.mxu0 0
    %265 = vmatprep.subr.bf16.mxu0 0
    %266 = vmatpush2.bf16.msra.mxu0 0
    %267 = vmatprep.subr.bf16.mxu0 0
    %268 = vmatpush2.bf16.msra.mxu0 0
    %269 = vmatprep.subr.bf16.mxu0 0
    %270 = vmatpush2.bf16.msra.mxu0 0
    %271 = vmatprep.mubr.bf16.mxu0 0
    %272 = vmatmul.mubr.bf16.gmra.mxu0 %v237
    %v273 = vpop.f32.mrf.mxu0
    %v274 = vadd.f32 %v210, %v273
    %v275 = vpop.f32.mrf.mxu0
    %v276 = vpop.f32.mrf.mxu0
    %v277 = vpop.f32.mrf.mxu0
    %278 = vdwg.mxu0
    %v279 = vadd.f32 %v40, %v274
    %280 = vst.msk [vmem:[#allocation5] sm:$0xff] %vm66, %v279
    // Predicated region
    $region34: #{tpu_custom_call.1} parent=1 // pred_check
      _
    $region35: #{tpu_custom_call.1} parent=1 // pred_check_branch
      %282 = sbr.rel (0) target = $region37
    $region36: #{tpu_custom_call.1} parent=1 // pred_region
      %s284 = ssub.s32 128, 128
      %285 = vsyncadd [#allocation4], %s284
      %s287 = sshll.u32 [#allocation5], 4
      %s288 = int_to_ptr.vmem [resolvable:$true] %s287
      %290 = dma.vmem_to_hbm [thread:$0]  %s288, 128, %s7, [#allocation4]
    $region37: #{tpu_custom_call.1} parent=1 // pred_fallthru
      _
    // Predicated region
    $region38: #{tpu_custom_call.1} parent=1 // pred_check
      _
    $region39: #{tpu_custom_call.1} parent=1 // pred_check_branch
      %292 = sbr.rel (0) target = $region41
    $region40: #{tpu_custom_call.1} parent=1 // pred_region
      %293 = dma.done [#allocation4], 128
    $region41: #{tpu_custom_call.1} parent=1 // pred_fallthru
      _
    %294 = vsyncpa [#allocation3], 1
    %295 = vsyncpa [#allocation4], 1

</llo_original>
